<compile_context>
chip_gen: v5e
topology: v5e:2x2
jax: 0.10.0
libtpu: 0.0.40
codegen_flags: <defaults>
</compile_context>

<pallas_src>
import jax
import jax.numpy as jnp
from jax.experimental import pallas as pl
from jax.experimental.pallas import tpu as pltpu

_LANE = 128           # lane width: hidden dim is padded to this
_SUBLANE_TILE = 16    # batch-tile granularity (safe for bf16 sublane packing)
_MIN_SPLIT_ROWS = 128 # split batch into >=2 grid steps once n >= 2*this
_TILE_VMEM_BUDGET = 8 * 1024 * 1024  # per-call working-set budget (well < 32 MiB scoped)


def _round_up(x, m):
    return ((x + m - 1) // m) * m


def _blob_mlp_kernel(x_ref, w1_ref, b1_ref, w2_ref, b2_ref, w3_ref, b3_ref, o_ref):
    """Fused 3-layer MLP: relu(relu(x@W1+b1)@W2+b2)@W3+b3, f32 accumulation."""
    cdt = w1_ref.dtype                       # compute (MXU input) dtype
    x = x_ref[...].astype(cdt)               # in-kernel cast (free VPU slot)

    h1 = jnp.dot(x, w1_ref[...], preferred_element_type=jnp.float32) + b1_ref[...]
    h1 = jnp.maximum(h1, 0.0)

    h2 = jnp.dot(h1.astype(cdt), w2_ref[...],
                 preferred_element_type=jnp.float32) + b2_ref[...]
    h2 = jnp.maximum(h2, 0.0)

    out = jnp.dot(h2.astype(cdt), w3_ref[...],
                  preferred_element_type=jnp.float32) + b3_ref[...]
    o_ref[...] = out.astype(o_ref.dtype)     # (tile, O) store, O = true output width


def prepare_params(params, *, compute_dtype=jnp.bfloat16):
    """One-time weight prep (transpose to (in, out), lane-pad hidden dim, cast).

    params: PyTorch-style dict w1 (H,F), b1 (H,), w2 (H,H), b2 (H,), w3 (O,H), b3 (O,)
    compute_dtype: MXU input dtype (bf16 default; pass jnp.float32 for exactness).
    """
    h, f = params["w1"].shape
    o = params["w3"].shape[0]
    h_p = _round_up(h, _LANE)   # hidden dim lane-padded (exact: relu(0)=0, 0-weights add 0)

    def pad2(a, rows, cols):
        return jnp.pad(a, ((0, rows - a.shape[0]), (0, cols - a.shape[1])))

    return {
        "w1t": pad2(params["w1"].T, f, h_p).astype(compute_dtype),    # (F,  Hp)
        "w2t": pad2(params["w2"].T, h_p, h_p).astype(compute_dtype),  # (Hp, Hp)
        "w3t": pad2(params["w3"].T, h_p, o).astype(compute_dtype),    # (Hp, O)  <- output NOT padded
        "b1": jnp.pad(params["b1"], (0, h_p - h)).reshape(1, h_p).astype(jnp.float32),
        "b2": jnp.pad(params["b2"], (0, h_p - h)).reshape(1, h_p).astype(jnp.float32),
        "b3": params["b3"].reshape(1, o).astype(jnp.float32),
    }


def blob_model_forward(x, prepared, *, batch_tile=1024):
    """Fused BlobModel forward.

    x: (N, input_features) float32.
    prepared: output of prepare_params() (weights already transposed/padded/cast).
    Returns (N, output_features) float32.
    """
    n, f = x.shape
    w1t, b1 = prepared["w1t"], prepared["b1"]
    w2t, b2 = prepared["w2t"], prepared["b2"]
    w3t, b3 = prepared["w3t"], prepared["b3"]
    h_p = w1t.shape[1]
    o = w3t.shape[1]
    assert w1t.shape[0] == f, "input_features mismatch between x and prepared params"

    # --- batch tile selection -------------------------------------------------
    n_align = _round_up(n, _SUBLANE_TILE)
    # Per-row VMEM footprint: double-buffered x + out blocks, plus f32 hidden temps.
    row_bytes = 2 * f * 4 + 2 * o * 4 + 2 * h_p * 4
    vmem_cap = max(_SUBLANE_TILE,
                   (_TILE_VMEM_BUDGET // row_bytes) // _SUBLANE_TILE * _SUBLANE_TILE)
    tile = min(_round_up(max(batch_tile, _SUBLANE_TILE), _SUBLANE_TILE), n_align, vmem_cap)
    # For decent-size batches ensure >=2 grid steps so both v7x TCs get work
    # (dimension_semantics=("parallel",)); one extra step is noise on v5e/v6e.
    if n_align >= 2 * _MIN_SPLIT_ROWS:
        tile = min(tile, _round_up(pl.cdiv(n_align, 2), _SUBLANE_TILE))
    n_p = _round_up(n, tile)
    grid = (n_p // tile,)

    # Zero row-padding is exact (padded rows are sliced off below).
    x_p = x if n_p == n else jnp.pad(x, ((0, n_p - n), (0, 0)))

    # Weights/biases are tiny and grid-invariant: constant index_map keeps them
    # resident in VMEM (no re-DMA per step).
    full = lambda shape: pl.BlockSpec(shape, lambda i: (0,) * len(shape))

    w_bytes = jnp.dtype(w1t.dtype).itemsize
    w_elems = f * h_p + h_p * h_p + h_p * o
    cost = pl.CostEstimate(
        flops=2 * n_p * w_elems,
        transcendentals=0,
        bytes_accessed=(n_p * f * 4          # x in (f32)
                        + n_p * o * 4        # out (f32, de-padded)
                        + w_elems * w_bytes  # weights
                        + (2 * h_p + o) * 4),  # biases (f32)
    )

    out_p = pl.pallas_call(
        _blob_mlp_kernel,
        out_shape=jax.ShapeDtypeStruct((n_p, o), jnp.float32),
        grid_spec=pltpu.PrefetchScalarGridSpec(
            num_scalar_prefetch=0,
            grid=grid,
            in_specs=[
                pl.BlockSpec((tile, f), lambda i: (i, 0)),   # x tile (f32)
                full((f, h_p)),                              # W1^T
                full((1, h_p)),                              # b1
                full((h_p, h_p)),                            # W2^T
                full((1, h_p)),                              # b2
                full((h_p, o)),                              # W3^T (output width = O)
                full((1, o)),                                # b3
            ],
            out_specs=pl.BlockSpec((tile, o), lambda i: (i, 0)),
        ),
        compiler_params=pltpu.CompilerParams(
            dimension_semantics=("parallel",)),
        cost_estimate=cost,
    )(x_p, w1t, b1, w2t, b2, w3t, b3)

    # Only strip row padding if any was added (no lane padding to strip anymore).
    return out_p if n_p == n else out_p[:n]


def init_params(key, input_features, output_features, hidden_units):
    """Deterministic PyTorch-style (Kaiming-uniform-ish) init."""
    ks = jax.random.split(key, 6)

    def lin_init(kw, kb, fan_in, fan_out):
        bound = 1.0 / jnp.sqrt(fan_in)
        w = jax.random.uniform(kw, (fan_out, fan_in), jnp.float32, -bound, bound)
        b = jax.random.uniform(kb, (fan_out,), jnp.float32, -bound, bound)
        return w, b

    w1, b1 = lin_init(ks[0], ks[1], input_features, hidden_units)
    w2, b2 = lin_init(ks[2], ks[3], hidden_units, hidden_units)
    w3, b3 = lin_init(ks[4], ks[5], hidden_units, output_features)
    return {"w1": w1, "b1": b1, "w2": w2, "b2": b2, "w3": w3, "b3": b3}


def _reference_forward(x, p):
    """Pure-JAX f32 reference matching PyTorch semantics exactly."""
    h1 = jnp.maximum(x @ p["w1"].T + p["b1"], 0.0)
    h2 = jnp.maximum(h1 @ p["w2"].T + p["b2"], 0.0)
    return h2 @ p["w3"].T + p["b3"]


if __name__ == "__main__":
    INPUT_FEATURES = 4
    OUTPUT_FEATURES = 4
    HIDDEN_UNITS = 32
    BATCH = 1000  # ragged on purpose: exercises row padding + 2-step grid

    key = jax.random.PRNGKey(0)
    k_x, k_p = jax.random.split(key)

    x = jax.random.normal(k_x, (BATCH, INPUT_FEATURES), dtype=jnp.float32)
    params = init_params(k_p, INPUT_FEATURES, OUTPUT_FEATURES, HIDDEN_UNITS)

    # Weight prep hoisted out of the per-call path (done once per model).
    prepared = prepare_params(params)  # bf16 MXU inputs; pass compute_dtype=jnp.float32 for exactness

    # N=1000 -> tile=512, padded N=1024, grid=(2,): >=512-row tiles (v5e/v6e)
    # and two parallel steps (both v7x TensorCores busy).
    out = blob_model_forward(x, prepared, batch_tile=1024)
    out = jax.block_until_ready(out)

    ref = _reference_forward(x, params)
    assert out.shape == (BATCH, OUTPUT_FEATURES)
    max_err = float(jnp.max(jnp.abs(out - ref)))
    assert jnp.allclose(out, ref, atol=5e-2, rtol=5e-2), (
        f"mismatch vs reference, max abs err {max_err}")

    print("KERNEL_OK")
</pallas_src>

<mosaic_0001>
module attributes {stable_mosaic.version = 11 : i64} {
  func.func @_blob_mlp_kernel(%arg0: i32, %arg1: memref<512x4xf32, #tpu.memory_space<vmem>>, %arg2: memref<4x128xbf16, #tpu.memory_space<vmem>>, %arg3: memref<1x128xf32, #tpu.memory_space<vmem>>, %arg4: memref<128x128xbf16, #tpu.memory_space<vmem>>, %arg5: memref<1x128xf32, #tpu.memory_space<vmem>>, %arg6: memref<128x4xbf16, #tpu.memory_space<vmem>>, %arg7: memref<1x4xf32, #tpu.memory_space<vmem>>, %arg8: memref<512x4xf32, #tpu.memory_space<vmem>>) attributes {dimension_semantics = [#tpu.dimension_semantics<parallel>], iteration_bounds = array<i64: 2>, scalar_prefetch = 0 : i64, scratch_operands = 0 : i64, tpu.core_type = #tpu.core_type<tc>, window_params = [{transform_indices = @transform_0, window_bounds = array<i64: 512, 4>}, {pipeline_mode = #tpu.pipeline_mode<synchronous>, transform_indices = @transform_1, window_bounds = array<i64: 4, 128>}, {pipeline_mode = #tpu.pipeline_mode<synchronous>, transform_indices = @transform_2, window_bounds = array<i64: 1, 128>}, {pipeline_mode = #tpu.pipeline_mode<synchronous>, transform_indices = @transform_3, window_bounds = array<i64: 128, 128>}, {pipeline_mode = #tpu.pipeline_mode<synchronous>, transform_indices = @transform_4, window_bounds = array<i64: 1, 128>}, {pipeline_mode = #tpu.pipeline_mode<synchronous>, transform_indices = @transform_5, window_bounds = array<i64: 128, 4>}, {pipeline_mode = #tpu.pipeline_mode<synchronous>, transform_indices = @transform_6, window_bounds = array<i64: 1, 4>}, {transform_indices = @transform_7, window_bounds = array<i64: 512, 4>}]} {
    %c0 = arith.constant 0 : index
    %c0_0 = arith.constant 0 : index
    %0 = vector.load %arg1[%c0, %c0_0] : memref<512x4xf32, #tpu.memory_space<vmem>>, vector<512x4xf32>
    %1 = arith.truncf %0 : vector<512x4xf32> to vector<512x4xbf16>
    %c0_1 = arith.constant 0 : index
    %c0_2 = arith.constant 0 : index
    %2 = vector.load %arg2[%c0_1, %c0_2] : memref<4x128xbf16, #tpu.memory_space<vmem>>, vector<4x128xbf16>
    %cst = arith.constant dense<0.000000e+00> : vector<512x128xf32>
    %3 = tpu.matmul %1, %2, %cst {dimension_numbers = #tpu.dot_dimension_numbers<[1], [0], [0], [1], [0, 0, 1, 1], [], []>} : vector<512x4xbf16>, vector<4x128xbf16>, vector<512x128xf32> -> vector<512x128xf32>
    %c0_3 = arith.constant 0 : index
    %c0_4 = arith.constant 0 : index
    %4 = vector.load %arg3[%c0_3, %c0_4] : memref<1x128xf32, #tpu.memory_space<vmem>>, vector<1x128xf32>
    %5 = vector.broadcast %4 : vector<1x128xf32> to vector<512x128xf32>
    %6 = arith.addf %3, %5 : vector<512x128xf32>
    %cst_5 = arith.constant 0.000000e+00 : f32
    %7 = vector.broadcast %cst_5 : f32 to vector<512x128xf32>
    %8 = arith.maximumf %6, %7 : vector<512x128xf32>
    %9 = arith.truncf %8 : vector<512x128xf32> to vector<512x128xbf16>
    %c0_6 = arith.constant 0 : index
    %c0_7 = arith.constant 0 : index
    %10 = vector.load %arg4[%c0_6, %c0_7] : memref<128x128xbf16, #tpu.memory_space<vmem>>, vector<128x128xbf16>
    %cst_8 = arith.constant dense<0.000000e+00> : vector<512x128xf32>
    %11 = tpu.matmul %9, %10, %cst_8 {dimension_numbers = #tpu.dot_dimension_numbers<[1], [0], [0], [1], [0, 0, 1, 1], [], []>} : vector<512x128xbf16>, vector<128x128xbf16>, vector<512x128xf32> -> vector<512x128xf32>
    %c0_9 = arith.constant 0 : index
    %c0_10 = arith.constant 0 : index
    %12 = vector.load %arg5[%c0_9, %c0_10] : memref<1x128xf32, #tpu.memory_space<vmem>>, vector<1x128xf32>
    %13 = vector.broadcast %12 : vector<1x128xf32> to vector<512x128xf32>
    %14 = arith.addf %11, %13 : vector<512x128xf32>
    %cst_11 = arith.constant 0.000000e+00 : f32
    %15 = vector.broadcast %cst_11 : f32 to vector<512x128xf32>
    %16 = arith.maximumf %14, %15 : vector<512x128xf32>
    %17 = arith.truncf %16 : vector<512x128xf32> to vector<512x128xbf16>
    %c0_12 = arith.constant 0 : index
    %c0_13 = arith.constant 0 : index
    %18 = vector.load %arg6[%c0_12, %c0_13] : memref<128x4xbf16, #tpu.memory_space<vmem>>, vector<128x4xbf16>
    %cst_14 = arith.constant dense<0.000000e+00> : vector<512x4xf32>
    %19 = tpu.matmul %17, %18, %cst_14 {dimension_numbers = #tpu.dot_dimension_numbers<[1], [0], [0], [1], [0, 0, 1, 1], [], []>} : vector<512x128xbf16>, vector<128x4xbf16>, vector<512x4xf32> -> vector<512x4xf32>
    %c0_15 = arith.constant 0 : index
    %c0_16 = arith.constant 0 : index
    %20 = vector.load %arg7[%c0_15, %c0_16] : memref<1x4xf32, #tpu.memory_space<vmem>>, vector<1x4xf32>
    %21 = vector.broadcast %20 : vector<1x4xf32> to vector<512x4xf32>
    %22 = arith.addf %19, %21 : vector<512x4xf32>
    %c0_17 = arith.constant 0 : index
    %c0_18 = arith.constant 0 : index
    %23 = vector.load %arg8[%c0_17, %c0_18] : memref<512x4xf32, #tpu.memory_space<vmem>>, vector<512x4xf32>
    tpu.vector_store %arg8[%c0_17, %c0_18], %22 {strides = array<i32>} : memref<512x4xf32, #tpu.memory_space<vmem>>, vector<512x4xf32>,
    return
  }
  func.func @transform_0(%arg0: i32) -> (i32, i32) {
    %c0_i32 = arith.constant 0 : i32
    %c0_i32_0 = arith.constant 0 : i32
    return %arg0, %c0_i32 : i32, i32
  }
  func.func @transform_1(%arg0: i32) -> (i32, i32) {
    %c0_i32 = arith.constant 0 : i32
    %c0_i32_0 = arith.constant 0 : i32
    %c0_i32_1 = arith.constant 0 : i32
    return %c0_i32, %c0_i32_0 : i32, i32
  }
  func.func @transform_2(%arg0: i32) -> (i32, i32) {
    %c0_i32 = arith.constant 0 : i32
    %c0_i32_0 = arith.constant 0 : i32
    %c0_i32_1 = arith.constant 0 : i32
    return %c0_i32, %c0_i32_0 : i32, i32
  }
  func.func @transform_3(%arg0: i32) -> (i32, i32) {
    %c0_i32 = arith.constant 0 : i32
    %c0_i32_0 = arith.constant 0 : i32
    %c0_i32_1 = arith.constant 0 : i32
    return %c0_i32, %c0_i32_0 : i32, i32
  }
  func.func @transform_4(%arg0: i32) -> (i32, i32) {
    %c0_i32 = arith.constant 0 : i32
    %c0_i32_0 = arith.constant 0 : i32
    %c0_i32_1 = arith.constant 0 : i32
    return %c0_i32, %c0_i32_0 : i32, i32
  }
  func.func @transform_5(%arg0: i32) -> (i32, i32) {
    %c0_i32 = arith.constant 0 : i32
    %c0_i32_0 = arith.constant 0 : i32
    %c0_i32_1 = arith.constant 0 : i32
    return %c0_i32, %c0_i32_0 : i32, i32
  }
  func.func @transform_6(%arg0: i32) -> (i32, i32) {
    %c0_i32 = arith.constant 0 : i32
    %c0_i32_0 = arith.constant 0 : i32
    %c0_i32_1 = arith.constant 0 : i32
    return %c0_i32, %c0_i32_0 : i32, i32
  }
  func.func @transform_7(%arg0: i32) -> (i32, i32) {
    %c0_i32 = arith.constant 0 : i32
    %c0_i32_0 = arith.constant 0 : i32
    return %arg0, %c0_i32 : i32, i32
  }
}

</mosaic_0001>

<llo_original>
// kernel: tpu_custom_call.1
$region0: #{tpu_custom_call.1}
  #allocation0 [shape = 'u32[]', space=smem, size = 0x4, offset = 0x4, fixed_abs, tag = 'smem constant byte address 0x4 - core index']
  #allocation1 [shape = 'u32[72,128]{1,0:T(1,128)}', space=vmem, size = 0x9000, scoped, tag = 'internal scratch']
  %s0 = inlined_call_operand.vmem [shape: f32[1024,4], index: 0, kind: input, shape index: {}]
  %s1 = inlined_call_operand.vmem [shape: bf16[4,128], index: 1, kind: input, shape index: {}]
  %s2 = inlined_call_operand.vmem [shape: f32[1,128], index: 2, kind: input, shape index: {}]
  %s3 = inlined_call_operand.vmem [shape: bf16[128,128], index: 3, kind: input, shape index: {}]
  %s4 = inlined_call_operand.vmem [shape: f32[1,128], index: 4, kind: input, shape index: {}]
  %s5 = inlined_call_operand.vmem [shape: bf16[128,4], index: 5, kind: input, shape index: {}]
  %s6 = inlined_call_operand.vmem [shape: f32[1,4], index: 6, kind: input, shape index: {}]
  %s7 = inlined_call_operand.vmem [shape: f32[1024,4], index: 7, kind: output, shape index: {}]
  %s8 = sld [smem:[#allocation0]]
  $region61: #{tpu_custom_call.1} parent=0
    _
  %s10 = ssub.s32 1, %s8
  %s11 = scalar_select 0, %s10, %s8
  loop: start=0, step=1, limit=4
  $region2: #{tpu_custom_call.1} parent=0 // loop_pre_header
    _
  $region3: #{tpu_custom_call.1} parent=0 // loop_header
    %s13 = sphi 0, %s17
    %p14 = scmp.ge.s32.totalorder %s13, 4
    %s23 = sphi 0, %s25
    %s26 = sphi 0, %s23
    %s27 = sphi 0, %s26
    %s43 = sphi 0, %s27
    %s47 = sphi 0, %s47
    %s49 = sphi 0, %s47
    %s50 = sphi 0, %s49
    %s64 = sphi 0, %s50
    %s68 = sphi 0, %s68
    %s70 = sphi 0, %s68
    %s71 = sphi 0, %s70
    %s85 = sphi 0, %s71
    %s89 = sphi 0, %s89
    %s91 = sphi 0, %s89
    %s92 = sphi 0, %s91
    %s106 = sphi 0, %s92
    %s110 = sphi 0, %s110
    %s112 = sphi 0, %s110
    %s113 = sphi 0, %s112
    %s127 = sphi 0, %s113
    %s131 = sphi 0, %s131
    %s133 = sphi 0, %s131
    %s134 = sphi 0, %s133
    %s148 = sphi 0, %s134
    %s152 = sphi 0, %s152
    %s154 = sphi 0, %s152
    %s155 = sphi 0, %s154
    %s169 = sphi 0, %s155
    %s175 = sphi 0, %s177
    %s178 = sphi 0, %s175
    %s179 = sphi 0, %s178
    %s195 = sphi 0, %s179
  $region4: #{tpu_custom_call.1} parent=0 // loop_header_branch
    %16 = sbr.rel (%p14) target = $region8
  $region5: #{tpu_custom_call.1} parent=0 // loop_body
    %s18 = ssub.s32 %s13, 1
    %s19 = ssub.s32 %s13, 2
    %s20 = sadd.s32 %s13, 1
    %s21 = ssub.s32 %s13, %s20
    %p22 = scmp.eq.s32.totalorder %s21, 0
    %s24 = sadd.s32 %s23, 1
    %s25 = scalar_select %p22, %s23, %s24
    %p28 = pneg %p22
    %p29 = scmp.eq.s32.totalorder %s13, 1
    %p30 = por %p28, %p29
    %p31 = scmp.ne.s32.totalorder %s23, %s26
    %p32 = scmp.eq.s32.totalorder %s13, 0
    %p33 = por %p31, %p32
    %p34 = scmp.ne.s32.totalorder %s23, %s26
    %p35 = scmp.eq.s32.totalorder %s18, 1
    %p36 = por %p34, %p35
    %p37 = scmp.ne.s32.totalorder %s26, %s27
    %p38 = scmp.eq.s32.totalorder %s18, 0
    %p39 = por %p37, %p38
    %p40 = scmp.ne.s32.totalorder %s26, %s27
    %p41 = scmp.eq.s32.totalorder %s19, 1
    %p42 = por %p40, %p41
    %p44 = scmp.ne.s32.totalorder %s27, %s43
    %p45 = scmp.eq.s32.totalorder %s19, 0
    %p46 = por %p44, %p45
    %s48 = sadd.s32 %s47, 1
    %p51 = scmp.eq.s32.totalorder %s13, 1
    %p52 = scmp.ne.s32.totalorder %s47, %s49
    %p53 = scmp.eq.s32.totalorder %s13, 0
    %p54 = por %p52, %p53
    %p55 = scmp.ne.s32.totalorder %s47, %s49
    %p56 = scmp.eq.s32.totalorder %s18, 1
    %p57 = por %p55, %p56
    %p58 = scmp.ne.s32.totalorder %s49, %s50
    %p59 = scmp.eq.s32.totalorder %s18, 0
    %p60 = por %p58, %p59
    %p61 = scmp.ne.s32.totalorder %s49, %s50
    %p62 = scmp.eq.s32.totalorder %s19, 1
    %p63 = por %p61, %p62
    %p65 = scmp.ne.s32.totalorder %s50, %s64
    %p66 = scmp.eq.s32.totalorder %s19, 0
    %p67 = por %p65, %p66
    %s69 = sadd.s32 %s68, 1
    %p72 = scmp.eq.s32.totalorder %s13, 1
    %p73 = scmp.ne.s32.totalorder %s68, %s70
    %p74 = scmp.eq.s32.totalorder %s13, 0
    %p75 = por %p73, %p74
    %p76 = scmp.ne.s32.totalorder %s68, %s70
    %p77 = scmp.eq.s32.totalorder %s18, 1
    %p78 = por %p76, %p77
    %p79 = scmp.ne.s32.totalorder %s70, %s71
    %p80 = scmp.eq.s32.totalorder %s18, 0
    %p81 = por %p79, %p80
    %p82 = scmp.ne.s32.totalorder %s70, %s71
    %p83 = scmp.eq.s32.totalorder %s19, 1
    %p84 = por %p82, %p83
    %p86 = scmp.ne.s32.totalorder %s71, %s85
    %p87 = scmp.eq.s32.totalorder %s19, 0
    %p88 = por %p86, %p87
    %s90 = sadd.s32 %s89, 1
    %p93 = scmp.eq.s32.totalorder %s13, 1
    %p94 = scmp.ne.s32.totalorder %s89, %s91
    %p95 = scmp.eq.s32.totalorder %s13, 0
    %p96 = por %p94, %p95
    %p97 = scmp.ne.s32.totalorder %s89, %s91
    %p98 = scmp.eq.s32.totalorder %s18, 1
    %p99 = por %p97, %p98
    %p100 = scmp.ne.s32.totalorder %s91, %s92
    %p101 = scmp.eq.s32.totalorder %s18, 0
    %p102 = por %p100, %p101
    %p103 = scmp.ne.s32.totalorder %s91, %s92
    %p104 = scmp.eq.s32.totalorder %s19, 1
    %p105 = por %p103, %p104
    %p107 = scmp.ne.s32.totalorder %s92, %s106
    %p108 = scmp.eq.s32.totalorder %s19, 0
    %p109 = por %p107, %p108
    %s111 = sadd.s32 %s110, 1
    %p114 = scmp.eq.s32.totalorder %s13, 1
    %p115 = scmp.ne.s32.totalorder %s110, %s112
    %p116 = scmp.eq.s32.totalorder %s13, 0
    %p117 = por %p115, %p116
    %p118 = scmp.ne.s32.totalorder %s110, %s112
    %p119 = scmp.eq.s32.totalorder %s18, 1
    %p120 = por %p118, %p119
    %p121 = scmp.ne.s32.totalorder %s112, %s113
    %p122 = scmp.eq.s32.totalorder %s18, 0
    %p123 = por %p121, %p122
    %p124 = scmp.ne.s32.totalorder %s112, %s113
    %p125 = scmp.eq.s32.totalorder %s19, 1
    %p126 = por %p124, %p125
    %p128 = scmp.ne.s32.totalorder %s113, %s127
    %p129 = scmp.eq.s32.totalorder %s19, 0
    %p130 = por %p128, %p129
    %s132 = sadd.s32 %s131, 1
    %p135 = scmp.eq.s32.totalorder %s13, 1
    %p136 = scmp.ne.s32.totalorder %s131, %s133
    %p137 = scmp.eq.s32.totalorder %s13, 0
    %p138 = por %p136, %p137
    %p139 = scmp.ne.s32.totalorder %s131, %s133
    %p140 = scmp.eq.s32.totalorder %s18, 1
    %p141 = por %p139, %p140
    %p142 = scmp.ne.s32.totalorder %s133, %s134
    %p143 = scmp.eq.s32.totalorder %s18, 0
    %p144 = por %p142, %p143
    %p145 = scmp.ne.s32.totalorder %s133, %s134
    %p146 = scmp.eq.s32.totalorder %s19, 1
    %p147 = por %p145, %p146
    %p149 = scmp.ne.s32.totalorder %s134, %s148
    %p150 = scmp.eq.s32.totalorder %s19, 0
    %p151 = por %p149, %p150
    %s153 = sadd.s32 %s152, 1
    %p156 = scmp.eq.s32.totalorder %s13, 1
    %p157 = scmp.ne.s32.totalorder %s152, %s154
    %p158 = scmp.eq.s32.totalorder %s13, 0
    %p159 = por %p157, %p158
    %p160 = scmp.ne.s32.totalorder %s152, %s154
    %p161 = scmp.eq.s32.totalorder %s18, 1
    %p162 = por %p160, %p161
    %p163 = scmp.ne.s32.totalorder %s154, %s155
    %p164 = scmp.eq.s32.totalorder %s18, 0
    %p165 = por %p163, %p164
    %p166 = scmp.ne.s32.totalorder %s154, %s155
    %p167 = scmp.eq.s32.totalorder %s19, 1
    %p168 = por %p166, %p167
    %p170 = scmp.ne.s32.totalorder %s155, %s169
    %p171 = scmp.eq.s32.totalorder %s19, 0
    %p172 = por %p170, %p171
    %s173 = ssub.s32 %s13, %s20
    %p174 = scmp.eq.s32.totalorder %s173, 0
    %s176 = sadd.s32 %s175, 1
    %s177 = scalar_select %p174, %s175, %s176
    %p180 = pneg %p174
    %p181 = scmp.eq.s32.totalorder %s13, 1
    %p182 = por %p180, %p181
    %p183 = scmp.ne.s32.totalorder %s175, %s178
    %p184 = scmp.eq.s32.totalorder %s13, 0
    %p185 = por %p183, %p184
    %p186 = scmp.ne.s32.totalorder %s175, %s178
    %p187 = scmp.eq.s32.totalorder %s18, 1
    %p188 = por %p186, %p187
    %p189 = scmp.ne.s32.totalorder %s178, %s179
    %p190 = scmp.eq.s32.totalorder %s18, 0
    %p191 = por %p189, %p190
    %p192 = scmp.ne.s32.totalorder %s178, %s179
    %p193 = scmp.eq.s32.totalorder %s19, 1
    %p194 = por %p192, %p193
    %p196 = scmp.ne.s32.totalorder %s179, %s195
    %p197 = scmp.eq.s32.totalorder %s19, 0
    %p198 = por %p196, %p197
    %p199 = scmp.le.s32.totalorder 1, %s13
    %p200 = scmp.lt.s32.totalorder %s13, 3
    %p201 = pnand %p199, %p200
    %p202 = pneg %p201
    // Predicated region
    $region9: #{tpu_custom_call.1} parent=5 // pred_check
      _
    $region10: #{tpu_custom_call.1} parent=5 // pred_check_branch
      %204 = sbr.rel (%p201) target = $region12
    $region11: #{tpu_custom_call.1} parent=5 // pred_region
      %s205 = ssub.s32 %s13, 1
      // Predicated region
      $region13: #{tpu_custom_call.1} parent=11 // pred_check
        %p206 = pneg %p60
      $region14: #{tpu_custom_call.1} parent=11 // pred_check_branch
        %208 = sbr.rel (%p206) target = $region16
      $region15: #{tpu_custom_call.1} parent=11 // pred_region
        _
      $region16: #{tpu_custom_call.1} parent=11 // pred_fallthru
        _
      // Predicated region
      $region17: #{tpu_custom_call.1} parent=11 // pred_check
        %p209 = pneg %p81
      $region18: #{tpu_custom_call.1} parent=11 // pred_check_branch
        %211 = sbr.rel (%p209) target = $region20
      $region19: #{tpu_custom_call.1} parent=11 // pred_region
        _
      $region20: #{tpu_custom_call.1} parent=11 // pred_fallthru
        _
      // Predicated region
      $region21: #{tpu_custom_call.1} parent=11 // pred_check
        %p212 = pneg %p102
      $region22: #{tpu_custom_call.1} parent=11 // pred_check_branch
        %214 = sbr.rel (%p212) target = $region24
      $region23: #{tpu_custom_call.1} parent=11 // pred_region
        _
      $region24: #{tpu_custom_call.1} parent=11 // pred_fallthru
        _
      // Predicated region
      $region25: #{tpu_custom_call.1} parent=11 // pred_check
        %p215 = pneg %p123
      $region26: #{tpu_custom_call.1} parent=11 // pred_check_branch
        %217 = sbr.rel (%p215) target = $region28
      $region27: #{tpu_custom_call.1} parent=11 // pred_region
        _
      $region28: #{tpu_custom_call.1} parent=11 // pred_fallthru
        _
      // Predicated region
      $region29: #{tpu_custom_call.1} parent=11 // pred_check
        %p218 = pneg %p144
      $region30: #{tpu_custom_call.1} parent=11 // pred_check_branch
        %220 = sbr.rel (%p218) target = $region32
      $region31: #{tpu_custom_call.1} parent=11 // pred_region
        _
      $region32: #{tpu_custom_call.1} parent=11 // pred_fallthru
        _
      // Predicated region
      $region33: #{tpu_custom_call.1} parent=11 // pred_check
        %p221 = pneg %p165
      $region34: #{tpu_custom_call.1} parent=11 // pred_check_branch
        %223 = sbr.rel (%p221) target = $region36
      $region35: #{tpu_custom_call.1} parent=11 // pred_region
        _
      $region36: #{tpu_custom_call.1} parent=11 // pred_fallthru
        _
    $region12: #{tpu_custom_call.1} parent=5 // pred_fallthru
      _
    %p224 = scmp.lt.s32.totalorder %s13, 2
    // Predicated region
    $region37: #{tpu_custom_call.1} parent=5 // pred_check
      %p225 = pneg %p224
    $region38: #{tpu_custom_call.1} parent=5 // pred_check_branch
      %227 = sbr.rel (%p225) target = $region40
    $region39: #{tpu_custom_call.1} parent=5 // pred_region
      // Predicated region
      $region41: #{tpu_custom_call.1} parent=39 // pred_check
        %p228 = pneg %p33
      $region42: #{tpu_custom_call.1} parent=39 // pred_check_branch
        %230 = sbr.rel (%p228) target = $region44
      $region43: #{tpu_custom_call.1} parent=39 // pred_region
        %s231 = smul.u32 64, %s13
        %p232 = scmp.lt.s32.totalorder %s231, 127
        %s233 = scalar_select %p232, %s231, 127
        %s234 = smul.addr %s233, 8
        %s235 = scalar_lea.vmem %s0, %s234
        %s236 = smul.u32 64, %s13
      $region44: #{tpu_custom_call.1} parent=39 // pred_fallthru
        _
    $region40: #{tpu_custom_call.1} parent=5 // pred_fallthru
      _
    %p237 = scmp.le.s32.totalorder 1, %s13
    %p238 = scmp.lt.s32.totalorder %s13, 3
    %p239 = pnand %p237, %p238
    %p240 = pneg %p239
    // Predicated region
    $region45: #{tpu_custom_call.1} parent=5 // pred_check
      _
    $region46: #{tpu_custom_call.1} parent=5 // pred_check_branch
      %242 = sbr.rel (%p239) target = $region48
    $region47: #{tpu_custom_call.1} parent=5 // pred_region
      %s243 = ssub.s32 %s13, 1
      %s244 = smul.u32 64, %s18
      %p245 = scmp.lt.s32.totalorder %s244, 127
      %s246 = scalar_select %p245, %s244, 127
      %s247 = smul.addr %s246, 8
      %s248 = scalar_lea.vmem %s0, %s247
      %p249 = pneg %p39
      %p250 = pneg %p36
      %p251 = pneg %p60
      %p252 = pneg %p57
      %p253 = pneg %p81
      %p254 = pneg %p78
      %p255 = pneg %p102
      %p256 = pneg %p99
      %p257 = pneg %p123
      %p258 = pneg %p120
      %p259 = pneg %p144
      %p260 = pneg %p141
      %p261 = pneg %p165
      %p262 = pneg %p162
      %p263 = pneg %p191
      %p264 = pneg %p188
      %s265 = smul.u32 64, %s18
      %p266 = scmp.lt.s32.totalorder %s265, 127
      %s267 = scalar_select %p266, %s265, 127
      %s268 = smul.addr %s267, 8
      %s269 = scalar_lea.vmem %s7, %s268
      %s270 = smul.u32 64, %s18
      %p271 = scmp.lt.s32.totalorder %s270, 127
      %s272 = scalar_select %p271, %s270, 127
      %s273 = smul.addr %s272, 8
      %s274 = scalar_lea.vmem %s0, %s273
      %s275 = smul.u32 64, %s18
      %s276 = smul.u32 64, %s18
      %p277 = scmp.lt.s32.totalorder %s276, 127
      %s278 = scalar_select %p277, %s276, 127
      %s279 = smul.addr %s278, 8
      %s280 = scalar_lea.vmem %s7, %s279
      %s281 = smul.u32 64, %s18
      %v283 = vld [vmem:[%s274] sm:$0xff]
      %v284 = vld [vmem:[%s274 + $0x8] sm:$0xff]
      %v285 = vld [vmem:[%s274 + $0x10] sm:$0xff]
      %v286 = vld [vmem:[%s274 + $0x18] sm:$0xff]
      %v287 = vld [vmem:[%s274 + $0x20] sm:$0xff]
      %v288 = vld [vmem:[%s274 + $0x28] sm:$0xff]
      %v289 = vld [vmem:[%s274 + $0x30] sm:$0xff]
      %v290 = vld [vmem:[%s274 + $0x38] sm:$0xff]
      %v291 = vld [vmem:[%s274 + $0x40] sm:$0xff]
      %v292 = vld [vmem:[%s274 + $0x48] sm:$0xff]
      %v293 = vld [vmem:[%s274 + $0x50] sm:$0xff]
      %v294 = vld [vmem:[%s274 + $0x58] sm:$0xff]
      %v295 = vld [vmem:[%s274 + $0x60] sm:$0xff]
      %v296 = vld [vmem:[%s274 + $0x68] sm:$0xff]
      %v297 = vld [vmem:[%s274 + $0x70] sm:$0xff]
      %v298 = vld [vmem:[%s274 + $0x78] sm:$0xff]
      %v299 = vld [vmem:[%s274 + $0x80] sm:$0xff]
      %v300 = vld [vmem:[%s274 + $0x88] sm:$0xff]
      %v301 = vld [vmem:[%s274 + $0x90] sm:$0xff]
      %v302 = vld [vmem:[%s274 + $0x98] sm:$0xff]
      %v303 = vld [vmem:[%s274 + $0xa0] sm:$0xff]
      %v304 = vld [vmem:[%s274 + $0xa8] sm:$0xff]
      %v305 = vld [vmem:[%s274 + $0xb0] sm:$0xff]
      %v306 = vld [vmem:[%s274 + $0xb8] sm:$0xff]
      %v307 = vld [vmem:[%s274 + $0xc0] sm:$0xff]
      %v308 = vld [vmem:[%s274 + $0xc8] sm:$0xff]
      %v309 = vld [vmem:[%s274 + $0xd0] sm:$0xff]
      %v310 = vld [vmem:[%s274 + $0xd8] sm:$0xff]
      %v311 = vld [vmem:[%s274 + $0xe0] sm:$0xff]
      %v312 = vld [vmem:[%s274 + $0xe8] sm:$0xff]
      %v313 = vld [vmem:[%s274 + $0xf0] sm:$0xff]
      %v314 = vld [vmem:[%s274 + $0xf8] sm:$0xff]
      %v315 = vld [vmem:[%s274 + $0x100] sm:$0xff]
      %v316 = vld [vmem:[%s274 + $0x108] sm:$0xff]
      %v317 = vld [vmem:[%s274 + $0x110] sm:$0xff]
      %v318 = vld [vmem:[%s274 + $0x118] sm:$0xff]
      %v319 = vld [vmem:[%s274 + $0x120] sm:$0xff]
      %v320 = vld [vmem:[%s274 + $0x128] sm:$0xff]
      %v321 = vld [vmem:[%s274 + $0x130] sm:$0xff]
      %v322 = vld [vmem:[%s274 + $0x138] sm:$0xff]
      %v323 = vld [vmem:[%s274 + $0x140] sm:$0xff]
      %v324 = vld [vmem:[%s274 + $0x148] sm:$0xff]
      %v325 = vld [vmem:[%s274 + $0x150] sm:$0xff]
      %v326 = vld [vmem:[%s274 + $0x158] sm:$0xff]
      %v327 = vld [vmem:[%s274 + $0x160] sm:$0xff]
      %v328 = vld [vmem:[%s274 + $0x168] sm:$0xff]
      %v329 = vld [vmem:[%s274 + $0x170] sm:$0xff]
      %v330 = vld [vmem:[%s274 + $0x178] sm:$0xff]
      %v331 = vld [vmem:[%s274 + $0x180] sm:$0xff]
      %v332 = vld [vmem:[%s274 + $0x188] sm:$0xff]
      %v333 = vld [vmem:[%s274 + $0x190] sm:$0xff]
      %v334 = vld [vmem:[%s274 + $0x198] sm:$0xff]
      %v335 = vld [vmem:[%s274 + $0x1a0] sm:$0xff]
      %v336 = vld [vmem:[%s274 + $0x1a8] sm:$0xff]
      %v337 = vld [vmem:[%s274 + $0x1b0] sm:$0xff]
      %v338 = vld [vmem:[%s274 + $0x1b8] sm:$0xff]
      %v339 = vld [vmem:[%s274 + $0x1c0] sm:$0xff]
      %v340 = vld [vmem:[%s274 + $0x1c8] sm:$0xff]
      %v341 = vld [vmem:[%s274 + $0x1d0] sm:$0xff]
      %v342 = vld [vmem:[%s274 + $0x1d8] sm:$0xff]
      %v343 = vld [vmem:[%s274 + $0x1e0] sm:$0xff]
      %v344 = vld [vmem:[%s274 + $0x1e8] sm:$0xff]
      %v345 = vld [vmem:[%s274 + $0x1f0] sm:$0xff]
      %v346 = vld [vmem:[%s274 + $0x1f8] sm:$0xff]
      %v347 = vpack.c.bf16 %v284, %v283
      %v348 = vpack.c.bf16 %v286, %v285
      %v349 = vpack.c.bf16 %v288, %v287
      %v350 = vpack.c.bf16 %v290, %v289
      %v351 = vpack.c.bf16 %v292, %v291
      %v352 = vpack.c.bf16 %v294, %v293
      %v353 = vpack.c.bf16 %v296, %v295
      %v354 = vpack.c.bf16 %v298, %v297
      %v355 = vpack.c.bf16 %v300, %v299
      %v356 = vpack.c.bf16 %v302, %v301
      %v357 = vpack.c.bf16 %v304, %v303
      %v358 = vpack.c.bf16 %v306, %v305
      %v359 = vpack.c.bf16 %v308, %v307
      %v360 = vpack.c.bf16 %v310, %v309
      %v361 = vpack.c.bf16 %v312, %v311
      %v362 = vpack.c.bf16 %v314, %v313
      %v363 = vpack.c.bf16 %v316, %v315
      %v364 = vpack.c.bf16 %v318, %v317
      %v365 = vpack.c.bf16 %v320, %v319
      %v366 = vpack.c.bf16 %v322, %v321
      %v367 = vpack.c.bf16 %v324, %v323
      %v368 = vpack.c.bf16 %v326, %v325
      %v369 = vpack.c.bf16 %v328, %v327
      %v370 = vpack.c.bf16 %v330, %v329
      %v371 = vpack.c.bf16 %v332, %v331
      %v372 = vpack.c.bf16 %v334, %v333
      %v373 = vpack.c.bf16 %v336, %v335
      %v374 = vpack.c.bf16 %v338, %v337
      %v375 = vpack.c.bf16 %v340, %v339
      %v376 = vpack.c.bf16 %v342, %v341
      %v377 = vpack.c.bf16 %v344, %v343
      %v378 = vpack.c.bf16 %v346, %v345
      %v379 = vld [vmem:[%s1] sm:$0x3]
      %v380 = vld [vmem:[%s2] sm:$0x1]
      %v382 = vperm.slane %v380, 0
      %vm384 = vcmask 31744
      %v386 = vsel %vm384, %v347, 0
      %v389 = vsel %vm384, %v348, 0
      %v392 = vsel %vm384, %v349, 0
      %v395 = vsel %vm384, %v350, 0
      %v398 = vsel %vm384, %v351, 0
      %v401 = vsel %vm384, %v352, 0
      %v404 = vsel %vm384, %v353, 0
      %v407 = vsel %vm384, %v354, 0
      %v410 = vsel %vm384, %v355, 0
      %v413 = vsel %vm384, %v356, 0
      %v416 = vsel %vm384, %v357, 0
      %v419 = vsel %vm384, %v358, 0
      %v422 = vsel %vm384, %v359, 0
      %v425 = vsel %vm384, %v360, 0
      %v428 = vsel %vm384, %v361, 0
      %v431 = vsel %vm384, %v362, 0
      %v434 = vsel %vm384, %v363, 0
      %v437 = vsel %vm384, %v364, 0
      %v440 = vsel %vm384, %v365, 0
      %v443 = vsel %vm384, %v366, 0
      %v446 = vsel %vm384, %v367, 0
      %v449 = vsel %vm384, %v368, 0
      %v452 = vsel %vm384, %v369, 0
      %v455 = vsel %vm384, %v370, 0
      %v458 = vsel %vm384, %v371, 0
      %v461 = vsel %vm384, %v372, 0
      %v464 = vsel %vm384, %v373, 0
      %v467 = vsel %vm384, %v374, 0
      %v470 = vsel %vm384, %v375, 0
      %v473 = vsel %vm384, %v376, 0
      %v476 = vsel %vm384, %v377, 0
      %v479 = vsel %vm384, %v378, 0
      %vm481 = vcmask 1041408
      %v483 = vsel %vm481, %v379, 0
      %485 = vmatpush.bf16.msra.mxu0 0
      %486 = vmatpush.bf16.msra.mxu0 0
      %487 = vmatpush.bf16.msra.mxu0 0
      %488 = vmatpush.bf16.msra.mxu0 0
      %489 = vmatpush.bf16.msra.mxu0 0
      %490 = vmatpush.bf16.msra.mxu0 0
      %491 = vmatpush.bf16.msra.mxu0 0
      %492 = vmatpush.bf16.msra.mxu0 %v483
      %493 = vmatmul.bf16.gmra.mxu0 %v386
      %v494 = vpop.f32.mrf.mxu0
      %v495 = vadd.f32 %v382, %v494
      %v496 = vpop.f32.mrf.mxu0
      %v497 = vadd.f32 %v382, %v496
      %498 = vmatmul.bf16.gmra.mxu0 %v389
      %v499 = vpop.f32.mrf.mxu0
      %v500 = vadd.f32 %v382, %v499
      %v501 = vpop.f32.mrf.mxu0
      %v502 = vadd.f32 %v382, %v501
      %503 = vmatmul.bf16.gmra.mxu0 %v392
      %v504 = vpop.f32.mrf.mxu0
      %v505 = vadd.f32 %v382, %v504
      %v506 = vpop.f32.mrf.mxu0
      %v507 = vadd.f32 %v382, %v506
      %508 = vmatmul.bf16.gmra.mxu0 %v395
      %v509 = vpop.f32.mrf.mxu0
      %v510 = vadd.f32 %v382, %v509
      %v511 = vpop.f32.mrf.mxu0
      %v512 = vadd.f32 %v382, %v511
      %513 = vmatmul.bf16.gmra.mxu0 %v398
      %v514 = vpop.f32.mrf.mxu0
      %v515 = vadd.f32 %v382, %v514
      %v516 = vpop.f32.mrf.mxu0
      %v517 = vadd.f32 %v382, %v516
      %518 = vmatmul.bf16.gmra.mxu0 %v401
      %v519 = vpop.f32.mrf.mxu0
      %v520 = vadd.f32 %v382, %v519
      %v521 = vpop.f32.mrf.mxu0
      %v522 = vadd.f32 %v382, %v521
      %523 = vmatmul.bf16.gmra.mxu0 %v404
      %v524 = vpop.f32.mrf.mxu0
      %v525 = vadd.f32 %v382, %v524
      %v526 = vpop.f32.mrf.mxu0
      %v527 = vadd.f32 %v382, %v526
      %528 = vmatmul.bf16.gmra.mxu0 %v407
      %v529 = vpop.f32.mrf.mxu0
      %v530 = vadd.f32 %v382, %v529
      %v531 = vpop.f32.mrf.mxu0
      %v532 = vadd.f32 %v382, %v531
      %533 = vmatmul.bf16.gmra.mxu0 %v410
      %v534 = vpop.f32.mrf.mxu0
      %v535 = vadd.f32 %v382, %v534
      %v536 = vpop.f32.mrf.mxu0
      %v537 = vadd.f32 %v382, %v536
      %538 = vmatmul.bf16.gmra.mxu0 %v413
      %v539 = vpop.f32.mrf.mxu0
      %v540 = vadd.f32 %v382, %v539
      %v541 = vpop.f32.mrf.mxu0
      %v542 = vadd.f32 %v382, %v541
      %543 = vmatmul.bf16.gmra.mxu0 %v416
      %v544 = vpop.f32.mrf.mxu0
      %v545 = vadd.f32 %v382, %v544
      %v546 = vpop.f32.mrf.mxu0
      %v547 = vadd.f32 %v382, %v546
      %548 = vmatmul.bf16.gmra.mxu0 %v419
      %v549 = vpop.f32.mrf.mxu0
      %v550 = vadd.f32 %v382, %v549
      %v551 = vpop.f32.mrf.mxu0
      %v552 = vadd.f32 %v382, %v551
      %553 = vmatmul.bf16.gmra.mxu0 %v422
      %v554 = vpop.f32.mrf.mxu0
      %v555 = vadd.f32 %v382, %v554
      %v556 = vpop.f32.mrf.mxu0
      %v557 = vadd.f32 %v382, %v556
      %558 = vmatmul.bf16.gmra.mxu0 %v425
      %v559 = vpop.f32.mrf.mxu0
      %v560 = vadd.f32 %v382, %v559
      %v561 = vpop.f32.mrf.mxu0
      %v562 = vadd.f32 %v382, %v561
      %563 = vmatmul.bf16.gmra.mxu0 %v428
      %v564 = vpop.f32.mrf.mxu0
      %v565 = vadd.f32 %v382, %v564
      %v566 = vpop.f32.mrf.mxu0
      %v567 = vadd.f32 %v382, %v566
      %568 = vmatmul.bf16.gmra.mxu0 %v431
      %v569 = vpop.f32.mrf.mxu0
      %v570 = vadd.f32 %v382, %v569
      %v571 = vpop.f32.mrf.mxu0
      %v572 = vadd.f32 %v382, %v571
      %573 = vmatmul.bf16.gmra.mxu0 %v434
      %v574 = vpop.f32.mrf.mxu0
      %v575 = vadd.f32 %v382, %v574
      %v576 = vpop.f32.mrf.mxu0
      %v577 = vadd.f32 %v382, %v576
      %578 = vmatmul.bf16.gmra.mxu0 %v437
      %v579 = vpop.f32.mrf.mxu0
      %v580 = vadd.f32 %v382, %v579
      %v581 = vpop.f32.mrf.mxu0
      %v582 = vadd.f32 %v382, %v581
      %583 = vmatmul.bf16.gmra.mxu0 %v440
      %v584 = vpop.f32.mrf.mxu0
      %v585 = vadd.f32 %v382, %v584
      %v586 = vpop.f32.mrf.mxu0
      %v587 = vadd.f32 %v382, %v586
      %588 = vmatmul.bf16.gmra.mxu0 %v443
      %v589 = vpop.f32.mrf.mxu0
      %v590 = vadd.f32 %v382, %v589
      %v591 = vpop.f32.mrf.mxu0
      %v592 = vadd.f32 %v382, %v591
      %593 = vmatmul.bf16.gmra.mxu0 %v446
      %v594 = vpop.f32.mrf.mxu0
      %v595 = vadd.f32 %v382, %v594
      %v596 = vpop.f32.mrf.mxu0
      %v597 = vadd.f32 %v382, %v596
      %598 = vmatmul.bf16.gmra.mxu0 %v449
      %v599 = vpop.f32.mrf.mxu0
      %v600 = vadd.f32 %v382, %v599
      %v601 = vpop.f32.mrf.mxu0
      %v602 = vadd.f32 %v382, %v601
      %603 = vmatmul.bf16.gmra.mxu0 %v452
      %v604 = vpop.f32.mrf.mxu0
      %v605 = vadd.f32 %v382, %v604
      %v606 = vpop.f32.mrf.mxu0
      %v607 = vadd.f32 %v382, %v606
      %608 = vmatmul.bf16.gmra.mxu0 %v455
      %v609 = vpop.f32.mrf.mxu0
      %v610 = vadd.f32 %v382, %v609
      %v611 = vpop.f32.mrf.mxu0
      %v612 = vadd.f32 %v382, %v611
      %613 = vmatmul.bf16.gmra.mxu0 %v458
      %v614 = vpop.f32.mrf.mxu0
      %v615 = vadd.f32 %v382, %v614
      %v616 = vpop.f32.mrf.mxu0
      %v617 = vadd.f32 %v382, %v616
      %618 = vmatmul.bf16.gmra.mxu0 %v461
      %v619 = vpop.f32.mrf.mxu0
      %v620 = vadd.f32 %v382, %v619
      %v621 = vpop.f32.mrf.mxu0
      %v622 = vadd.f32 %v382, %v621
      %623 = vmatmul.bf16.gmra.mxu0 %v464
      %v624 = vpop.f32.mrf.mxu0
      %v625 = vadd.f32 %v382, %v624
      %v626 = vpop.f32.mrf.mxu0
      %v627 = vadd.f32 %v382, %v626
      %628 = vmatmul.bf16.gmra.mxu0 %v467
      %v629 = vpop.f32.mrf.mxu0
      %v630 = vadd.f32 %v382, %v629
      %v631 = vpop.f32.mrf.mxu0
      %v632 = vadd.f32 %v382, %v631
      %633 = vmatmul.bf16.gmra.mxu0 %v470
      %v634 = vpop.f32.mrf.mxu0
      %v635 = vadd.f32 %v382, %v634
      %v636 = vpop.f32.mrf.mxu0
      %v637 = vadd.f32 %v382, %v636
      %638 = vmatmul.bf16.gmra.mxu0 %v473
      %v639 = vpop.f32.mrf.mxu0
      %v640 = vadd.f32 %v382, %v639
      %v641 = vpop.f32.mrf.mxu0
      %v642 = vadd.f32 %v382, %v641
      %643 = vmatmul.bf16.gmra.mxu0 %v476
      %v644 = vpop.f32.mrf.mxu0
      %v645 = vadd.f32 %v382, %v644
      %v646 = vpop.f32.mrf.mxu0
      %v647 = vadd.f32 %v382, %v646
      %648 = vmatmul.bf16.gmra.mxu0 %v479
      %v649 = vpop.f32.mrf.mxu0
      %v650 = vadd.f32 %v382, %v649
      %v651 = vpop.f32.mrf.mxu0
      %v652 = vadd.f32 %v382, %v651
      %653 = vdwg.mxu0
      %v654 = vmax.f32 %v495, 0.0
      %v655 = vmax.f32 %v497, 0.0
      %v656 = vmax.f32 %v500, 0.0
      %v657 = vmax.f32 %v502, 0.0
      %v658 = vmax.f32 %v505, 0.0
      %v659 = vmax.f32 %v507, 0.0
      %v660 = vmax.f32 %v510, 0.0
      %v661 = vmax.f32 %v512, 0.0
      %v662 = vmax.f32 %v515, 0.0
      %v663 = vmax.f32 %v517, 0.0
      %v664 = vmax.f32 %v520, 0.0
      %v665 = vmax.f32 %v522, 0.0
      %v666 = vmax.f32 %v525, 0.0
      %v667 = vmax.f32 %v527, 0.0
      %v668 = vmax.f32 %v530, 0.0
      %v669 = vmax.f32 %v532, 0.0
      %v670 = vmax.f32 %v535, 0.0
      %v671 = vmax.f32 %v537, 0.0
      %v672 = vmax.f32 %v540, 0.0
      %v673 = vmax.f32 %v542, 0.0
      %v674 = vmax.f32 %v545, 0.0
      %v675 = vmax.f32 %v547, 0.0
      %v676 = vmax.f32 %v550, 0.0
      %v677 = vmax.f32 %v552, 0.0
      %v678 = vmax.f32 %v555, 0.0
      %v679 = vmax.f32 %v557, 0.0
      %v680 = vmax.f32 %v560, 0.0
      %v681 = vmax.f32 %v562, 0.0
      %v682 = vmax.f32 %v565, 0.0
      %v683 = vmax.f32 %v567, 0.0
      %v684 = vmax.f32 %v570, 0.0
      %v685 = vmax.f32 %v572, 0.0
      %v686 = vmax.f32 %v575, 0.0
      %v687 = vmax.f32 %v577, 0.0
      %v688 = vmax.f32 %v580, 0.0
      %v689 = vmax.f32 %v582, 0.0
      %v690 = vmax.f32 %v585, 0.0
      %v691 = vmax.f32 %v587, 0.0
      %v692 = vmax.f32 %v590, 0.0
      %v693 = vmax.f32 %v592, 0.0
      %v694 = vmax.f32 %v595, 0.0
      %v695 = vmax.f32 %v597, 0.0
      %v696 = vmax.f32 %v600, 0.0
      %v697 = vmax.f32 %v602, 0.0
      %v698 = vmax.f32 %v605, 0.0
      %v699 = vmax.f32 %v607, 0.0
      %v700 = vmax.f32 %v610, 0.0
      %v701 = vmax.f32 %v612, 0.0
      %v702 = vmax.f32 %v615, 0.0
      %v703 = vmax.f32 %v617, 0.0
      %v704 = vmax.f32 %v620, 0.0
      %v705 = vmax.f32 %v622, 0.0
      %v706 = vmax.f32 %v625, 0.0
      %v707 = vmax.f32 %v627, 0.0
      %v708 = vmax.f32 %v630, 0.0
      %v709 = vmax.f32 %v632, 0.0
      %v710 = vmax.f32 %v635, 0.0
      %v711 = vmax.f32 %v637, 0.0
      %v712 = vmax.f32 %v640, 0.0
      %v713 = vmax.f32 %v642, 0.0
      %v714 = vmax.f32 %v645, 0.0
      %v715 = vmax.f32 %v647, 0.0
      %v716 = vmax.f32 %v650, 0.0
      %v717 = vmax.f32 %v652, 0.0
      %v718 = vpack.c.bf16 %v655, %v654
      %v719 = vpack.c.bf16 %v657, %v656
      %v720 = vpack.c.bf16 %v659, %v658
      %v721 = vpack.c.bf16 %v661, %v660
      %v722 = vpack.c.bf16 %v663, %v662
      %v723 = vpack.c.bf16 %v665, %v664
      %v724 = vpack.c.bf16 %v667, %v666
      %v725 = vpack.c.bf16 %v669, %v668
      %v726 = vpack.c.bf16 %v671, %v670
      %v727 = vpack.c.bf16 %v673, %v672
      %v728 = vpack.c.bf16 %v675, %v674
      %v729 = vpack.c.bf16 %v677, %v676
      %v730 = vpack.c.bf16 %v679, %v678
      %v731 = vpack.c.bf16 %v681, %v680
      %v732 = vpack.c.bf16 %v683, %v682
      %v733 = vpack.c.bf16 %v685, %v684
      %v734 = vpack.c.bf16 %v687, %v686
      %v735 = vpack.c.bf16 %v689, %v688
      %v736 = vpack.c.bf16 %v691, %v690
      %v737 = vpack.c.bf16 %v693, %v692
      %v738 = vpack.c.bf16 %v695, %v694
      %v739 = vpack.c.bf16 %v697, %v696
      %v740 = vpack.c.bf16 %v699, %v698
      %v741 = vpack.c.bf16 %v701, %v700
      %v742 = vpack.c.bf16 %v703, %v702
      %v743 = vpack.c.bf16 %v705, %v704
      %v744 = vpack.c.bf16 %v707, %v706
      %v745 = vpack.c.bf16 %v709, %v708
      %v746 = vpack.c.bf16 %v711, %v710
      %v747 = vpack.c.bf16 %v713, %v712
      %v748 = vpack.c.bf16 %v715, %v714
      %v749 = vpack.c.bf16 %v717, %v716
      %v750 = vld [vmem:[%s3] sm:$0xf]
      %v751 = vld [vmem:[%s3 + $0x4] sm:$0xf]
      %v752 = vld [vmem:[%s3 + $0x8] sm:$0xf]
      %v753 = vld [vmem:[%s3 + $0xc] sm:$0xf]
      %v754 = vld [vmem:[%s3 + $0x10] sm:$0xf]
      %v755 = vld [vmem:[%s3 + $0x14] sm:$0xf]
      %v756 = vld [vmem:[%s3 + $0x18] sm:$0xf]
      %v757 = vld [vmem:[%s3 + $0x1c] sm:$0xf]
      %v758 = vld [vmem:[%s3 + $0x20] sm:$0xf]
      %v759 = vld [vmem:[%s3 + $0x24] sm:$0xf]
      %v760 = vld [vmem:[%s3 + $0x28] sm:$0xf]
      %v761 = vld [vmem:[%s3 + $0x2c] sm:$0xf]
      %v762 = vld [vmem:[%s3 + $0x30] sm:$0xf]
      %v763 = vld [vmem:[%s3 + $0x34] sm:$0xf]
      %v764 = vld [vmem:[%s3 + $0x38] sm:$0xf]
      %v765 = vld [vmem:[%s3 + $0x3c] sm:$0xf]
      %v766 = vld [vmem:[%s4] sm:$0x1]
      %v768 = vperm.slane %v766, 0
      %v786 = vunpack.c.l.b16 %v750
      %v787 = vunpack.c.l.b16 %v751
      %v788 = vunpack.c.l.b16 %v752
      %v789 = vunpack.c.l.b16 %v753
      %v790 = vunpack.c.l.b16 %v754
      %v791 = vunpack.c.l.b16 %v755
      %v792 = vunpack.c.l.b16 %v756
      %v793 = vunpack.c.l.b16 %v757
      %v794 = vunpack.c.l.b16 %v758
      %v795 = vunpack.c.l.b16 %v759
      %v796 = vunpack.c.l.b16 %v760
      %v797 = vunpack.c.l.b16 %v761
      %v798 = vunpack.c.l.b16 %v762
      %v799 = vunpack.c.l.b16 %v763
      %v800 = vunpack.c.l.b16 %v764
      %v801 = vunpack.c.l.b16 %v765
      %v802 = vpack.c.b16 %v787, %v786
      %v803 = vpack.c.b16 %v789, %v788
      %v804 = vpack.c.b16 %v791, %v790
      %v805 = vpack.c.b16 %v793, %v792
      %v806 = vpack.c.b16 %v795, %v794
      %v807 = vpack.c.b16 %v797, %v796
      %v808 = vpack.c.b16 %v799, %v798
      %v809 = vpack.c.b16 %v801, %v800
      %818 = vmatpush.bf16.msra.mxu0 %v809
      %819 = vmatpush.bf16.msra.mxu0 %v808
      %820 = vmatpush.bf16.msra.mxu0 %v807
      %821 = vmatpush.bf16.msra.mxu0 %v806
      %822 = vmatpush.bf16.msra.mxu0 %v805
      %823 = vmatpush.bf16.msra.mxu0 %v804
      %824 = vmatpush.bf16.msra.mxu0 %v803
      %825 = vmatpush.bf16.msra.mxu0 %v802
      %826 = vmatmul.bf16.gmra.mxu0 %v718
      %v827 = vpop.f32.mrf.mxu0
      %v828 = vadd.f32 %v768, %v827
      %v829 = vpop.f32.mrf.mxu0
      %v830 = vadd.f32 %v768, %v829
      %831 = vmatmul.bf16.gmra.mxu0 %v719
      %v832 = vpop.f32.mrf.mxu0
      %v833 = vadd.f32 %v768, %v832
      %v834 = vpop.f32.mrf.mxu0
      %v835 = vadd.f32 %v768, %v834
      %836 = vmatmul.bf16.gmra.mxu0 %v720
      %v837 = vpop.f32.mrf.mxu0
      %v838 = vadd.f32 %v768, %v837
      %v839 = vpop.f32.mrf.mxu0
      %v840 = vadd.f32 %v768, %v839
      %841 = vmatmul.bf16.gmra.mxu0 %v721
      %v842 = vpop.f32.mrf.mxu0
      %v843 = vadd.f32 %v768, %v842
      %v844 = vpop.f32.mrf.mxu0
      %v845 = vadd.f32 %v768, %v844
      %846 = vmatmul.bf16.gmra.mxu0 %v722
      %v847 = vpop.f32.mrf.mxu0
      %v848 = vadd.f32 %v768, %v847
      %v849 = vpop.f32.mrf.mxu0
      %v850 = vadd.f32 %v768, %v849
      %851 = vmatmul.bf16.gmra.mxu0 %v723
      %v852 = vpop.f32.mrf.mxu0
      %v853 = vadd.f32 %v768, %v852
      %v854 = vpop.f32.mrf.mxu0
      %v855 = vadd.f32 %v768, %v854
      %856 = vmatmul.bf16.gmra.mxu0 %v724
      %v857 = vpop.f32.mrf.mxu0
      %v858 = vadd.f32 %v768, %v857
      %v859 = vpop.f32.mrf.mxu0
      %v860 = vadd.f32 %v768, %v859
      %861 = vmatmul.bf16.gmra.mxu0 %v725
      %v862 = vpop.f32.mrf.mxu0
      %v863 = vadd.f32 %v768, %v862
      %v864 = vpop.f32.mrf.mxu0
      %v865 = vadd.f32 %v768, %v864
      %866 = vmatmul.bf16.gmra.mxu0 %v726
      %v867 = vpop.f32.mrf.mxu0
      %v868 = vadd.f32 %v768, %v867
      %v869 = vpop.f32.mrf.mxu0
      %v870 = vadd.f32 %v768, %v869
      %871 = vmatmul.bf16.gmra.mxu0 %v727
      %v872 = vpop.f32.mrf.mxu0
      %v873 = vadd.f32 %v768, %v872
      %v874 = vpop.f32.mrf.mxu0
      %v875 = vadd.f32 %v768, %v874
      %876 = vmatmul.bf16.gmra.mxu0 %v728
      %v877 = vpop.f32.mrf.mxu0
      %v878 = vadd.f32 %v768, %v877
      %v879 = vpop.f32.mrf.mxu0
      %v880 = vadd.f32 %v768, %v879
      %881 = vmatmul.bf16.gmra.mxu0 %v729
      %v882 = vpop.f32.mrf.mxu0
      %v883 = vadd.f32 %v768, %v882
      %v884 = vpop.f32.mrf.mxu0
      %v885 = vadd.f32 %v768, %v884
      %886 = vmatmul.bf16.gmra.mxu0 %v730
      %v887 = vpop.f32.mrf.mxu0
      %v888 = vadd.f32 %v768, %v887
      %v889 = vpop.f32.mrf.mxu0
      %v890 = vadd.f32 %v768, %v889
      %891 = vmatmul.bf16.gmra.mxu0 %v731
      %v892 = vpop.f32.mrf.mxu0
      %v893 = vadd.f32 %v768, %v892
      %v894 = vpop.f32.mrf.mxu0
      %v895 = vadd.f32 %v768, %v894
      %896 = vmatmul.bf16.gmra.mxu0 %v732
      %v897 = vpop.f32.mrf.mxu0
      %v898 = vadd.f32 %v768, %v897
      %v899 = vpop.f32.mrf.mxu0
      %v900 = vadd.f32 %v768, %v899
      %901 = vmatmul.bf16.gmra.mxu0 %v733
      %v902 = vpop.f32.mrf.mxu0
      %v903 = vadd.f32 %v768, %v902
      %v904 = vpop.f32.mrf.mxu0
      %v905 = vadd.f32 %v768, %v904
      %906 = vmatmul.bf16.gmra.mxu0 %v734
      %v907 = vpop.f32.mrf.mxu0
      %v908 = vadd.f32 %v768, %v907
      %v909 = vpop.f32.mrf.mxu0
      %v910 = vadd.f32 %v768, %v909
      %911 = vmatmul.bf16.gmra.mxu0 %v735
      %v912 = vpop.f32.mrf.mxu0
      %v913 = vadd.f32 %v768, %v912
      %v914 = vpop.f32.mrf.mxu0
      %v915 = vadd.f32 %v768, %v914
      %916 = vmatmul.bf16.gmra.mxu0 %v736
      %v917 = vpop.f32.mrf.mxu0
      %v918 = vadd.f32 %v768, %v917
      %v919 = vpop.f32.mrf.mxu0
      %v920 = vadd.f32 %v768, %v919
      %921 = vmatmul.bf16.gmra.mxu0 %v737
      %v922 = vpop.f32.mrf.mxu0
      %v923 = vadd.f32 %v768, %v922
      %v924 = vpop.f32.mrf.mxu0
      %v925 = vadd.f32 %v768, %v924
      %926 = vmatmul.bf16.gmra.mxu0 %v738
      %v927 = vpop.f32.mrf.mxu0
      %v928 = vadd.f32 %v768, %v927
      %v929 = vpop.f32.mrf.mxu0
      %v930 = vadd.f32 %v768, %v929
      %931 = vmatmul.bf16.gmra.mxu0 %v739
      %v932 = vpop.f32.mrf.mxu0
      %v933 = vadd.f32 %v768, %v932
      %v934 = vpop.f32.mrf.mxu0
      %v935 = vadd.f32 %v768, %v934
      %936 = vmatmul.bf16.gmra.mxu0 %v740
      %v937 = vpop.f32.mrf.mxu0
      %v938 = vadd.f32 %v768, %v937
      %v939 = vpop.f32.mrf.mxu0
      %v940 = vadd.f32 %v768, %v939
      %941 = vmatmul.bf16.gmra.mxu0 %v741
      %v942 = vpop.f32.mrf.mxu0
      %v943 = vadd.f32 %v768, %v942
      %v944 = vpop.f32.mrf.mxu0
      %v945 = vadd.f32 %v768, %v944
      %946 = vmatmul.bf16.gmra.mxu0 %v742
      %v947 = vpop.f32.mrf.mxu0
      %v948 = vadd.f32 %v768, %v947
      %v949 = vpop.f32.mrf.mxu0
      %v950 = vadd.f32 %v768, %v949
      %951 = vmatmul.bf16.gmra.mxu0 %v743
      %v952 = vpop.f32.mrf.mxu0
      %v953 = vadd.f32 %v768, %v952
      %v954 = vpop.f32.mrf.mxu0
      %v955 = vadd.f32 %v768, %v954
      %956 = vmatmul.bf16.gmra.mxu0 %v744
      %v957 = vpop.f32.mrf.mxu0
      %v958 = vadd.f32 %v768, %v957
      %v959 = vpop.f32.mrf.mxu0
      %v960 = vadd.f32 %v768, %v959
      %961 = vmatmul.bf16.gmra.mxu0 %v745
      %v962 = vpop.f32.mrf.mxu0
      %v963 = vadd.f32 %v768, %v962
      %v964 = vpop.f32.mrf.mxu0
      %v965 = vadd.f32 %v768, %v964
      %966 = vmatmul.bf16.gmra.mxu0 %v746
      %v967 = vpop.f32.mrf.mxu0
      %v968 = vadd.f32 %v768, %v967
      %v969 = vpop.f32.mrf.mxu0
      %v970 = vadd.f32 %v768, %v969
      %971 = vmatmul.bf16.gmra.mxu0 %v747
      %v972 = vpop.f32.mrf.mxu0
      %v973 = vadd.f32 %v768, %v972
      %v974 = vpop.f32.mrf.mxu0
      %v975 = vadd.f32 %v768, %v974
      %976 = vmatmul.bf16.gmra.mxu0 %v748
      %v977 = vpop.f32.mrf.mxu0
      %v978 = vadd.f32 %v768, %v977
      %v979 = vpop.f32.mrf.mxu0
      %v980 = vadd.f32 %v768, %v979
      %981 = vmatmul.bf16.gmra.mxu0 %v749
      %v982 = vpop.f32.mrf.mxu0
      %v983 = vadd.f32 %v768, %v982
      %v984 = vpop.f32.mrf.mxu0
      %v985 = vadd.f32 %v768, %v984
      %986 = vdwg.mxu0
      %v987 = vmax.f32 %v828, 0.0
      %v988 = vmax.f32 %v830, 0.0
      %v989 = vmax.f32 %v833, 0.0
      %v990 = vmax.f32 %v835, 0.0
      %v991 = vmax.f32 %v838, 0.0
      %v992 = vmax.f32 %v840, 0.0
      %v993 = vmax.f32 %v843, 0.0
      %v994 = vmax.f32 %v845, 0.0
      %v995 = vmax.f32 %v848, 0.0
      %v996 = vmax.f32 %v850, 0.0
      %v997 = vmax.f32 %v853, 0.0
      %v998 = vmax.f32 %v855, 0.0
      %v999 = vmax.f32 %v858, 0.0
      %v1000 = vmax.f32 %v860, 0.0
      %v1001 = vmax.f32 %v863, 0.0
      %v1002 = vmax.f32 %v865, 0.0
      %v1003 = vmax.f32 %v868, 0.0
      %v1004 = vmax.f32 %v870, 0.0
      %v1005 = vmax.f32 %v873, 0.0
      %v1006 = vmax.f32 %v875, 0.0
      %v1007 = vmax.f32 %v878, 0.0
      %v1008 = vmax.f32 %v880, 0.0
      %v1009 = vmax.f32 %v883, 0.0
      %v1010 = vmax.f32 %v885, 0.0
      %v1011 = vmax.f32 %v888, 0.0
      %v1012 = vmax.f32 %v890, 0.0
      %v1013 = vmax.f32 %v893, 0.0
      %v1014 = vmax.f32 %v895, 0.0
      %v1015 = vmax.f32 %v898, 0.0
      %v1016 = vmax.f32 %v900, 0.0
      %v1017 = vmax.f32 %v903, 0.0
      %v1018 = vmax.f32 %v905, 0.0
      %v1019 = vmax.f32 %v908, 0.0
      %v1020 = vmax.f32 %v910, 0.0
      %v1021 = vmax.f32 %v913, 0.0
      %v1022 = vmax.f32 %v915, 0.0
      %v1023 = vmax.f32 %v918, 0.0
      %v1024 = vmax.f32 %v920, 0.0
      %v1025 = vmax.f32 %v923, 0.0
      %v1026 = vmax.f32 %v925, 0.0
      %v1027 = vmax.f32 %v928, 0.0
      %v1028 = vmax.f32 %v930, 0.0
      %v1029 = vmax.f32 %v933, 0.0
      %v1030 = vmax.f32 %v935, 0.0
      %v1031 = vmax.f32 %v938, 0.0
      %v1032 = vmax.f32 %v940, 0.0
      %v1033 = vmax.f32 %v943, 0.0
      %v1034 = vmax.f32 %v945, 0.0
      %v1035 = vmax.f32 %v948, 0.0
      %v1036 = vmax.f32 %v950, 0.0
      %v1037 = vmax.f32 %v953, 0.0
      %v1038 = vmax.f32 %v955, 0.0
      %v1039 = vmax.f32 %v958, 0.0
      %v1040 = vmax.f32 %v960, 0.0
      %v1041 = vmax.f32 %v963, 0.0
      %v1042 = vmax.f32 %v965, 0.0
      %v1043 = vmax.f32 %v968, 0.0
      %v1044 = vmax.f32 %v970, 0.0
      %v1045 = vmax.f32 %v973, 0.0
      %v1046 = vmax.f32 %v975, 0.0
      %v1047 = vmax.f32 %v978, 0.0
      %v1048 = vmax.f32 %v980, 0.0
      %v1049 = vmax.f32 %v983, 0.0
      %v1050 = vmax.f32 %v985, 0.0
      %v1051 = vpack.c.bf16 %v988, %v987
      %v1052 = vpack.c.bf16 %v990, %v989
      %v1053 = vpack.c.bf16 %v992, %v991
      %v1054 = vpack.c.bf16 %v994, %v993
      %v1055 = vpack.c.bf16 %v996, %v995
      %v1056 = vpack.c.bf16 %v998, %v997
      %v1057 = vpack.c.bf16 %v1000, %v999
      %v1058 = vpack.c.bf16 %v1002, %v1001
      %v1059 = vpack.c.bf16 %v1004, %v1003
      %v1060 = vpack.c.bf16 %v1006, %v1005
      %v1061 = vpack.c.bf16 %v1008, %v1007
      %v1062 = vpack.c.bf16 %v1010, %v1009
      %v1063 = vpack.c.bf16 %v1012, %v1011
      %v1064 = vpack.c.bf16 %v1014, %v1013
      %v1065 = vpack.c.bf16 %v1016, %v1015
      %v1066 = vpack.c.bf16 %v1018, %v1017
      %v1067 = vpack.c.bf16 %v1020, %v1019
      %v1068 = vpack.c.bf16 %v1022, %v1021
      %v1069 = vpack.c.bf16 %v1024, %v1023
      %v1070 = vpack.c.bf16 %v1026, %v1025
      %v1071 = vpack.c.bf16 %v1028, %v1027
      %v1072 = vpack.c.bf16 %v1030, %v1029
      %v1073 = vpack.c.bf16 %v1032, %v1031
      %v1074 = vpack.c.bf16 %v1034, %v1033
      %v1075 = vpack.c.bf16 %v1036, %v1035
      %v1076 = vpack.c.bf16 %v1038, %v1037
      %v1077 = vpack.c.bf16 %v1040, %v1039
      %v1078 = vpack.c.bf16 %v1042, %v1041
      %v1079 = vpack.c.bf16 %v1044, %v1043
      %v1080 = vpack.c.bf16 %v1046, %v1045
      %v1081 = vpack.c.bf16 %v1048, %v1047
      %v1082 = vpack.c.bf16 %v1050, %v1049
      %v1083 = vld [vmem:[%s5] sm:$0xf]
      %v1084 = vld [vmem:[%s5 + $0x4] sm:$0xf]
      %v1085 = vld [vmem:[%s5 + $0x8] sm:$0xf]
      %v1086 = vld [vmem:[%s5 + $0xc] sm:$0xf]
      %v1087 = vld [vmem:[%s5 + $0x10] sm:$0xf]
      %v1088 = vld [vmem:[%s5 + $0x14] sm:$0xf]
      %v1089 = vld [vmem:[%s5 + $0x18] sm:$0xf]
      %v1090 = vld [vmem:[%s5 + $0x1c] sm:$0xf]
      %v1091 = vld [vmem:[%s5 + $0x20] sm:$0xf]
      %v1092 = vld [vmem:[%s5 + $0x24] sm:$0xf]
      %v1093 = vld [vmem:[%s5 + $0x28] sm:$0xf]
      %v1094 = vld [vmem:[%s5 + $0x2c] sm:$0xf]
      %v1095 = vld [vmem:[%s5 + $0x30] sm:$0xf]
      %v1096 = vld [vmem:[%s5 + $0x34] sm:$0xf]
      %v1097 = vld [vmem:[%s5 + $0x38] sm:$0xf]
      %v1098 = vld [vmem:[%s5 + $0x3c] sm:$0xf]
      %v1099 = vld [vmem:[%s6] sm:$0x1]
      %v1101 = vperm.slane %v1099, 0
      %v1119 = vunpack.c.l.b16 %v1083
      %v1120 = vunpack.c.l.b16 %v1084
      %v1121 = vunpack.c.l.b16 %v1085
      %v1122 = vunpack.c.l.b16 %v1086
      %v1123 = vunpack.c.l.b16 %v1087
      %v1124 = vunpack.c.l.b16 %v1088
      %v1125 = vunpack.c.l.b16 %v1089
      %v1126 = vunpack.c.l.b16 %v1090
      %v1127 = vunpack.c.l.b16 %v1091
      %v1128 = vunpack.c.l.b16 %v1092
      %v1129 = vunpack.c.l.b16 %v1093
      %v1130 = vunpack.c.l.b16 %v1094
      %v1131 = vunpack.c.l.b16 %v1095
      %v1132 = vunpack.c.l.b16 %v1096
      %v1133 = vunpack.c.l.b16 %v1097
      %v1134 = vunpack.c.l.b16 %v1098
      %v1135 = vpack.c.b16 %v1120, %v1119
      %v1136 = vpack.c.b16 %v1122, %v1121
      %v1137 = vpack.c.b16 %v1124, %v1123
      %v1138 = vpack.c.b16 %v1126, %v1125
      %v1139 = vpack.c.b16 %v1128, %v1127
      %v1140 = vpack.c.b16 %v1130, %v1129
      %v1141 = vpack.c.b16 %v1132, %v1131
      %v1142 = vpack.c.b16 %v1134, %v1133
      %1151 = vmatpush.bf16.msra.mxu0 %v1142
      %1152 = vmatpush.bf16.msra.mxu0 %v1141
      %1153 = vmatpush.bf16.msra.mxu0 %v1140
      %1154 = vmatpush.bf16.msra.mxu0 %v1139
      %1155 = vmatpush.bf16.msra.mxu0 %v1138
      %1156 = vmatpush.bf16.msra.mxu0 %v1137
      %1157 = vmatpush.bf16.msra.mxu0 %v1136
      %1158 = vmatpush.bf16.msra.mxu0 %v1135
      %1159 = vmatmul.bf16.gmra.mxu0 %v1051
      %v1160 = vpop.f32.mrf.mxu0
      %v1161 = vadd.f32 %v1101, %v1160
      %v1162 = vpop.f32.mrf.mxu0
      %v1163 = vadd.f32 %v1101, %v1162
      %1164 = vmatmul.bf16.gmra.mxu0 %v1052
      %v1165 = vpop.f32.mrf.mxu0
      %v1166 = vadd.f32 %v1101, %v1165
      %v1167 = vpop.f32.mrf.mxu0
      %v1168 = vadd.f32 %v1101, %v1167
      %1169 = vmatmul.bf16.gmra.mxu0 %v1053
      %v1170 = vpop.f32.mrf.mxu0
      %v1171 = vadd.f32 %v1101, %v1170
      %v1172 = vpop.f32.mrf.mxu0
      %v1173 = vadd.f32 %v1101, %v1172
      %1174 = vmatmul.bf16.gmra.mxu0 %v1054
      %v1175 = vpop.f32.mrf.mxu0
      %v1176 = vadd.f32 %v1101, %v1175
      %v1177 = vpop.f32.mrf.mxu0
      %v1178 = vadd.f32 %v1101, %v1177
      %1179 = vmatmul.bf16.gmra.mxu0 %v1055
      %v1180 = vpop.f32.mrf.mxu0
      %v1181 = vadd.f32 %v1101, %v1180
      %v1182 = vpop.f32.mrf.mxu0
      %v1183 = vadd.f32 %v1101, %v1182
      %1184 = vmatmul.bf16.gmra.mxu0 %v1056
      %v1185 = vpop.f32.mrf.mxu0
      %v1186 = vadd.f32 %v1101, %v1185
      %v1187 = vpop.f32.mrf.mxu0
      %v1188 = vadd.f32 %v1101, %v1187
      %1189 = vmatmul.bf16.gmra.mxu0 %v1057
      %v1190 = vpop.f32.mrf.mxu0
      %v1191 = vadd.f32 %v1101, %v1190
      %v1192 = vpop.f32.mrf.mxu0
      %v1193 = vadd.f32 %v1101, %v1192
      %1194 = vmatmul.bf16.gmra.mxu0 %v1058
      %v1195 = vpop.f32.mrf.mxu0
      %v1196 = vadd.f32 %v1101, %v1195
      %v1197 = vpop.f32.mrf.mxu0
      %v1198 = vadd.f32 %v1101, %v1197
      %1199 = vmatmul.bf16.gmra.mxu0 %v1059
      %v1200 = vpop.f32.mrf.mxu0
      %v1201 = vadd.f32 %v1101, %v1200
      %v1202 = vpop.f32.mrf.mxu0
      %v1203 = vadd.f32 %v1101, %v1202
      %1204 = vmatmul.bf16.gmra.mxu0 %v1060
      %v1205 = vpop.f32.mrf.mxu0
      %v1206 = vadd.f32 %v1101, %v1205
      %v1207 = vpop.f32.mrf.mxu0
      %v1208 = vadd.f32 %v1101, %v1207
      %1209 = vmatmul.bf16.gmra.mxu0 %v1061
      %v1210 = vpop.f32.mrf.mxu0
      %v1211 = vadd.f32 %v1101, %v1210
      %v1212 = vpop.f32.mrf.mxu0
      %v1213 = vadd.f32 %v1101, %v1212
      %1214 = vmatmul.bf16.gmra.mxu0 %v1062
      %v1215 = vpop.f32.mrf.mxu0
      %v1216 = vadd.f32 %v1101, %v1215
      %v1217 = vpop.f32.mrf.mxu0
      %v1218 = vadd.f32 %v1101, %v1217
      %1219 = vmatmul.bf16.gmra.mxu0 %v1063
      %v1220 = vpop.f32.mrf.mxu0
      %v1221 = vadd.f32 %v1101, %v1220
      %v1222 = vpop.f32.mrf.mxu0
      %v1223 = vadd.f32 %v1101, %v1222
      %1224 = vmatmul.bf16.gmra.mxu0 %v1064
      %v1225 = vpop.f32.mrf.mxu0
      %v1226 = vadd.f32 %v1101, %v1225
      %v1227 = vpop.f32.mrf.mxu0
      %v1228 = vadd.f32 %v1101, %v1227
      %1229 = vmatmul.bf16.gmra.mxu0 %v1065
      %v1230 = vpop.f32.mrf.mxu0
      %v1231 = vadd.f32 %v1101, %v1230
      %v1232 = vpop.f32.mrf.mxu0
      %v1233 = vadd.f32 %v1101, %v1232
      %1234 = vmatmul.bf16.gmra.mxu0 %v1066
      %v1235 = vpop.f32.mrf.mxu0
      %v1236 = vadd.f32 %v1101, %v1235
      %v1237 = vpop.f32.mrf.mxu0
      %v1238 = vadd.f32 %v1101, %v1237
      %1239 = vmatmul.bf16.gmra.mxu0 %v1067
      %v1240 = vpop.f32.mrf.mxu0
      %v1241 = vadd.f32 %v1101, %v1240
      %v1242 = vpop.f32.mrf.mxu0
      %v1243 = vadd.f32 %v1101, %v1242
      %1244 = vmatmul.bf16.gmra.mxu0 %v1068
      %v1245 = vpop.f32.mrf.mxu0
      %v1246 = vadd.f32 %v1101, %v1245
      %v1247 = vpop.f32.mrf.mxu0
      %v1248 = vadd.f32 %v1101, %v1247
      %1249 = vmatmul.bf16.gmra.mxu0 %v1069
      %v1250 = vpop.f32.mrf.mxu0
      %v1251 = vadd.f32 %v1101, %v1250
      %v1252 = vpop.f32.mrf.mxu0
      %v1253 = vadd.f32 %v1101, %v1252
      %1254 = vmatmul.bf16.gmra.mxu0 %v1070
      %v1255 = vpop.f32.mrf.mxu0
      %v1256 = vadd.f32 %v1101, %v1255
      %v1257 = vpop.f32.mrf.mxu0
      %v1258 = vadd.f32 %v1101, %v1257
      %1259 = vmatmul.bf16.gmra.mxu0 %v1071
      %v1260 = vpop.f32.mrf.mxu0
      %v1261 = vadd.f32 %v1101, %v1260
      %v1262 = vpop.f32.mrf.mxu0
      %v1263 = vadd.f32 %v1101, %v1262
      %1264 = vmatmul.bf16.gmra.mxu0 %v1072
      %v1265 = vpop.f32.mrf.mxu0
      %v1266 = vadd.f32 %v1101, %v1265
      %v1267 = vpop.f32.mrf.mxu0
      %v1268 = vadd.f32 %v1101, %v1267
      %1269 = vmatmul.bf16.gmra.mxu0 %v1073
      %v1270 = vpop.f32.mrf.mxu0
      %v1271 = vadd.f32 %v1101, %v1270
      %v1272 = vpop.f32.mrf.mxu0
      %v1273 = vadd.f32 %v1101, %v1272
      %1274 = vmatmul.bf16.gmra.mxu0 %v1074
      %v1275 = vpop.f32.mrf.mxu0
      %v1276 = vadd.f32 %v1101, %v1275
      %v1277 = vpop.f32.mrf.mxu0
      %v1278 = vadd.f32 %v1101, %v1277
      %1279 = vmatmul.bf16.gmra.mxu0 %v1075
      %v1280 = vpop.f32.mrf.mxu0
      %v1281 = vadd.f32 %v1101, %v1280
      %v1282 = vpop.f32.mrf.mxu0
      %v1283 = vadd.f32 %v1101, %v1282
      %1284 = vmatmul.bf16.gmra.mxu0 %v1076
      %v1285 = vpop.f32.mrf.mxu0
      %v1286 = vadd.f32 %v1101, %v1285
      %v1287 = vpop.f32.mrf.mxu0
      %v1288 = vadd.f32 %v1101, %v1287
      %1289 = vmatmul.bf16.gmra.mxu0 %v1077
      %v1290 = vpop.f32.mrf.mxu0
      %v1291 = vadd.f32 %v1101, %v1290
      %v1292 = vpop.f32.mrf.mxu0
      %v1293 = vadd.f32 %v1101, %v1292
      %1294 = vmatmul.bf16.gmra.mxu0 %v1078
      %v1295 = vpop.f32.mrf.mxu0
      %v1296 = vadd.f32 %v1101, %v1295
      %v1297 = vpop.f32.mrf.mxu0
      %v1298 = vadd.f32 %v1101, %v1297
      %1299 = vmatmul.bf16.gmra.mxu0 %v1079
      %v1300 = vpop.f32.mrf.mxu0
      %v1301 = vadd.f32 %v1101, %v1300
      %v1302 = vpop.f32.mrf.mxu0
      %v1303 = vadd.f32 %v1101, %v1302
      %1304 = vmatmul.bf16.gmra.mxu0 %v1080
      %v1305 = vpop.f32.mrf.mxu0
      %v1306 = vadd.f32 %v1101, %v1305
      %v1307 = vpop.f32.mrf.mxu0
      %v1308 = vadd.f32 %v1101, %v1307
      %1309 = vmatmul.bf16.gmra.mxu0 %v1081
      %v1310 = vpop.f32.mrf.mxu0
      %v1311 = vadd.f32 %v1101, %v1310
      %v1312 = vpop.f32.mrf.mxu0
      %v1313 = vadd.f32 %v1101, %v1312
      %1314 = vmatmul.bf16.gmra.mxu0 %v1082
      %v1315 = vpop.f32.mrf.mxu0
      %v1316 = vadd.f32 %v1101, %v1315
      %v1317 = vpop.f32.mrf.mxu0
      %v1318 = vadd.f32 %v1101, %v1317
      %1319 = vdwg.mxu0
      %1320 = vst.msk [vmem:[%s280] sm:$0xff] %vm384, %v1161
      %1321 = vst.msk [vmem:[%s280 + $0x8] sm:$0xff] %vm384, %v1163
      %1322 = vst.msk [vmem:[%s280 + $0x10] sm:$0xff] %vm384, %v1166
      %1323 = vst.msk [vmem:[%s280 + $0x18] sm:$0xff] %vm384, %v1168
      %1324 = vst.msk [vmem:[%s280 + $0x20] sm:$0xff] %vm384, %v1171
      %1325 = vst.msk [vmem:[%s280 + $0x28] sm:$0xff] %vm384, %v1173
      %1326 = vst.msk [vmem:[%s280 + $0x30] sm:$0xff] %vm384, %v1176
      %1327 = vst.msk [vmem:[%s280 + $0x38] sm:$0xff] %vm384, %v1178
      %1328 = vst.msk [vmem:[%s280 + $0x40] sm:$0xff] %vm384, %v1181
      %1329 = vst.msk [vmem:[%s280 + $0x48] sm:$0xff] %vm384, %v1183
      %1330 = vst.msk [vmem:[%s280 + $0x50] sm:$0xff] %vm384, %v1186
      %1331 = vst.msk [vmem:[%s280 + $0x58] sm:$0xff] %vm384, %v1188
      %1332 = vst.msk [vmem:[%s280 + $0x60] sm:$0xff] %vm384, %v1191
      %1333 = vst.msk [vmem:[%s280 + $0x68] sm:$0xff] %vm384, %v1193
      %1334 = vst.msk [vmem:[%s280 + $0x70] sm:$0xff] %vm384, %v1196
      %1335 = vst.msk [vmem:[%s280 + $0x78] sm:$0xff] %vm384, %v1198
      %1336 = vst.msk [vmem:[%s280 + $0x80] sm:$0xff] %vm384, %v1201
      %1337 = vst.msk [vmem:[%s280 + $0x88] sm:$0xff] %vm384, %v1203
      %1338 = vst.msk [vmem:[%s280 + $0x90] sm:$0xff] %vm384, %v1206
      %1339 = vst.msk [vmem:[%s280 + $0x98] sm:$0xff] %vm384, %v1208
      %1340 = vst.msk [vmem:[%s280 + $0xa0] sm:$0xff] %vm384, %v1211
      %1341 = vst.msk [vmem:[%s280 + $0xa8] sm:$0xff] %vm384, %v1213
      %1342 = vst.msk [vmem:[%s280 + $0xb0] sm:$0xff] %vm384, %v1216
      %1343 = vst.msk [vmem:[%s280 + $0xb8] sm:$0xff] %vm384, %v1218
      %1344 = vst.msk [vmem:[%s280 + $0xc0] sm:$0xff] %vm384, %v1221
      %1345 = vst.msk [vmem:[%s280 + $0xc8] sm:$0xff] %vm384, %v1223
      %1346 = vst.msk [vmem:[%s280 + $0xd0] sm:$0xff] %vm384, %v1226
      %1347 = vst.msk [vmem:[%s280 + $0xd8] sm:$0xff] %vm384, %v1228
      %1348 = vst.msk [vmem:[%s280 + $0xe0] sm:$0xff] %vm384, %v1231
      %1349 = vst.msk [vmem:[%s280 + $0xe8] sm:$0xff] %vm384, %v1233
      %1350 = vst.msk [vmem:[%s280 + $0xf0] sm:$0xff] %vm384, %v1236
      %1351 = vst.msk [vmem:[%s280 + $0xf8] sm:$0xff] %vm384, %v1238
      %1352 = vst.msk [vmem:[%s280 + $0x100] sm:$0xff] %vm384, %v1241
      %1353 = vst.msk [vmem:[%s280 + $0x108] sm:$0xff] %vm384, %v1243
      %1354 = vst.msk [vmem:[%s280 + $0x110] sm:$0xff] %vm384, %v1246
      %1355 = vst.msk [vmem:[%s280 + $0x118] sm:$0xff] %vm384, %v1248
      %1356 = vst.msk [vmem:[%s280 + $0x120] sm:$0xff] %vm384, %v1251
      %1357 = vst.msk [vmem:[%s280 + $0x128] sm:$0xff] %vm384, %v1253
      %1358 = vst.msk [vmem:[%s280 + $0x130] sm:$0xff] %vm384, %v1256
      %1359 = vst.msk [vmem:[%s280 + $0x138] sm:$0xff] %vm384, %v1258
      %1360 = vst.msk [vmem:[%s280 + $0x140] sm:$0xff] %vm384, %v1261
      %1361 = vst.msk [vmem:[%s280 + $0x148] sm:$0xff] %vm384, %v1263
      %1362 = vst.msk [vmem:[%s280 + $0x150] sm:$0xff] %vm384, %v1266
      %1363 = vst.msk [vmem:[%s280 + $0x158] sm:$0xff] %vm384, %v1268
      %1364 = vst.msk [vmem:[%s280 + $0x160] sm:$0xff] %vm384, %v1271
      %1365 = vst.msk [vmem:[%s280 + $0x168] sm:$0xff] %vm384, %v1273
      %1366 = vst.msk [vmem:[%s280 + $0x170] sm:$0xff] %vm384, %v1276
      %1367 = vst.msk [vmem:[%s280 + $0x178] sm:$0xff] %vm384, %v1278
      %1368 = vst.msk [vmem:[%s280 + $0x180] sm:$0xff] %vm384, %v1281
      %1369 = vst.msk [vmem:[%s280 + $0x188] sm:$0xff] %vm384, %v1283
      %1370 = vst.msk [vmem:[%s280 + $0x190] sm:$0xff] %vm384, %v1286
      %1371 = vst.msk [vmem:[%s280 + $0x198] sm:$0xff] %vm384, %v1288
      %1372 = vst.msk [vmem:[%s280 + $0x1a0] sm:$0xff] %vm384, %v1291
      %1373 = vst.msk [vmem:[%s280 + $0x1a8] sm:$0xff] %vm384, %v1293
      %1374 = vst.msk [vmem:[%s280 + $0x1b0] sm:$0xff] %vm384, %v1296
      %1375 = vst.msk [vmem:[%s280 + $0x1b8] sm:$0xff] %vm384, %v1298
      %1376 = vst.msk [vmem:[%s280 + $0x1c0] sm:$0xff] %vm384, %v1301
      %1377 = vst.msk [vmem:[%s280 + $0x1c8] sm:$0xff] %vm384, %v1303
      %1378 = vst.msk [vmem:[%s280 + $0x1d0] sm:$0xff] %vm384, %v1306
      %1379 = vst.msk [vmem:[%s280 + $0x1d8] sm:$0xff] %vm384, %v1308
      %1380 = vst.msk [vmem:[%s280 + $0x1e0] sm:$0xff] %vm384, %v1311
      %1381 = vst.msk [vmem:[%s280 + $0x1e8] sm:$0xff] %vm384, %v1313
      %1382 = vst.msk [vmem:[%s280 + $0x1f0] sm:$0xff] %vm384, %v1316
      %1383 = vst.msk [vmem:[%s280 + $0x1f8] sm:$0xff] %vm384, %v1318
      %s1384 = smul.u32 64, %s18
      %p1385 = scmp.lt.s32.totalorder %s1384, 127
      %s1386 = scalar_select %p1385, %s1384, 127
      %s1387 = smul.addr %s1386, 8
      %s1388 = scalar_lea.vmem %s7, %s1387
      // Predicated region
      $region49: #{tpu_custom_call.1} parent=47 // pred_check
        %p1389 = pneg %p188
      $region50: #{tpu_custom_call.1} parent=47 // pred_check_branch
        %1391 = sbr.rel (%p1389) target = $region52
      $region51: #{tpu_custom_call.1} parent=47 // pred_region
        %s1392 = smul.u32 64, %s18
      $region52: #{tpu_custom_call.1} parent=47 // pred_fallthru
        _
    $region48: #{tpu_custom_call.1} parent=5 // pred_fallthru
      _
    %p1393 = scmp.le.s32.totalorder 2, %s13
    // Predicated region
    $region53: #{tpu_custom_call.1} parent=5 // pred_check
      %p1394 = pneg %p1393
    $region54: #{tpu_custom_call.1} parent=5 // pred_check_branch
      %1396 = sbr.rel (%p1394) target = $region56
    $region55: #{tpu_custom_call.1} parent=5 // pred_region
      %s1397 = ssub.s32 %s13, 2
      // Predicated region
      $region57: #{tpu_custom_call.1} parent=55 // pred_check
        %p1398 = pneg %p194
      $region58: #{tpu_custom_call.1} parent=55 // pred_check_branch
        %1400 = sbr.rel (%p1398) target = $region60
      $region59: #{tpu_custom_call.1} parent=55 // pred_region
        %s1401 = smul.u32 64, %s19
        %p1402 = scmp.lt.s32.totalorder %s1401, 127
        %s1403 = scalar_select %p1402, %s1401, 127
        %s1404 = smul.addr %s1403, 8
        %s1405 = scalar_lea.vmem %s7, %s1404
      $region60: #{tpu_custom_call.1} parent=55 // pred_fallthru
        _
    $region56: #{tpu_custom_call.1} parent=5 // pred_fallthru
      _
  $region6: #{tpu_custom_call.1} parent=0 // loop_footer
    %s17 = sadd.s32 1, %s13
  $region7: #{tpu_custom_call.1} parent=0 // loop_footer_branch
    %12 = sbr.rel target = $region3
  $region8: #{tpu_custom_call.1} parent=0 // loop_exit
    _

</llo_original>
